<compile_context>
chip_gen: v7x
topology: tpu7x:2x2x1
jax: 0.10.0
libtpu: 0.0.40
codegen_flags: <defaults>
</compile_context>

<pallas_src>
import functools

import jax
import jax.numpy as jnp
from jax.experimental import pallas as pl
from jax.experimental.pallas import tpu as pltpu


def _decoder_kernel(x_ref, w1_ref, b1_ref, w2_ref, b2_ref, o_ref, h_ref):
    # x_ref:  (TB, H)  f32   batch tile (cast to bf16 in-kernel)
    # w1_ref: (H, H)   bf16  resident, single-buffered
    # b1_ref: (1, H)   f32   resident, single-buffered
    # w2_ref: (H, TN)  bf16  column tile (single-buffered when TN == D_pad)
    # b2_ref: (1, TN)  f32
    # o_ref:  (TB, TN) out_dtype
    # h_ref:  (TB, H)  bf16  VMEM scratch caching relu(fc1(x)) across j tiles

    # fc1 + bias + ReLU only on the first column tile of each batch tile;
    # the cached activation is reused for every subsequent j.
    @pl.when(pl.program_id(1) == 0)
    def _():
        h = jnp.dot(x_ref[...].astype(jnp.bfloat16), w1_ref[...],
                    preferred_element_type=jnp.float32) + b1_ref[...]
        h_ref[...] = jnp.maximum(h, 0.0).astype(h_ref.dtype)   # ReLU in f32 on the VPU

    y = jnp.dot(h_ref[...], w2_ref[...],
                preferred_element_type=jnp.float32) + b2_ref[...]
    o_ref[...] = y.astype(o_ref.dtype)


def _round_up(x, m):
    return (x + m - 1) // m * m


@functools.lru_cache(maxsize=1)
def _vmem_budget_bytes():
    """Per-generation VMEM budget with headroom for Mosaic internal scratch.

    ~48 MiB on v7x (64 MiB physical per TC), ~96 MiB on v5e/v6e (128 MiB).
    """
    phys = 64 << 20
    try:
        phys = int(pltpu.get_tpu_info().vmem_capacity_bytes)
    except Exception:
        pass
    return int(min(phys * 3 // 4, 100 << 20))


def _footprint_bytes(block_b, block_n, H, D_pad, out_itemsize):
    nd = D_pad // block_n
    w2_bufs = 1 if nd == 1 else 2              # single-buffered when resident
    return (2 * block_b * H * 4                # x tiles (f32, double-buffered)
            + block_b * H * 2                  # h scratch (bf16)
            + H * H * 2 + H * 4                # W1 + b1 (single-buffered, resident)
            + w2_bufs * (H * block_n * 2 + block_n * 4)   # W2 / b2 tiles
            + 2 * block_b * block_n * out_itemsize)       # output tiles (dbl-buf)


def _choose_tiles(B, H, D_pad, out_itemsize):
    budget = _vmem_budget_bytes()
    # Batch tile: as big as the batch allows (the grid is a serial loop on
    # single-TC chips, so don't force multiple steps), capped by VMEM budget.
    block_b = 16
    for cand in (512, 256, 128, 64, 32, 16):
        bb = min(cand, _round_up(B, 16))
        if _footprint_bytes(bb, min(128, D_pad), H, D_pad, out_itemsize) <= budget:
            block_b = bb
            break
    # Column tile: full width when it fits (W2 stays resident, fc1 never
    # recomputed); otherwise the largest 128-multiple divisor that fits.
    block_n = 128
    for cand in [D_pad] + [c for c in (4096, 2048, 1024, 512, 256, 128)
                           if c < D_pad and D_pad % c == 0]:
        if _footprint_bytes(block_b, cand, H, D_pad, out_itemsize) <= budget:
            block_n = cand
            break
    return block_b, block_n, budget


def _block_spec(shape, index_map, *, single_buffer=False):
    if single_buffer:
        try:
            return pl.BlockSpec(shape, index_map, pipeline_mode=pl.Buffered(1))
        except Exception:   # older jax without pipeline_mode / Buffered
            pass
    return pl.BlockSpec(shape, index_map)


@functools.partial(jax.jit, static_argnames=("out_dim", "out_dtype"))
def decoder_forward(x, w1, b1, w2, b2, *, out_dim=None, out_dtype=jnp.float32):
    """fc2(relu(fc1(x))).

    x:  (B, H) float.  w1: (H, H), b1: (1, H), w2: (H, D[_pad]), b2: (1, D[_pad])
    with weights stored as (in_features, out_features).  `out_dim` slices the
    (possibly padded) output back to the true feature count.
    """
    B, H = x.shape
    D_in = w2.shape[1]
    if out_dim is None:
        out_dim = D_in

    out_itemsize = jnp.dtype(out_dtype).itemsize
    D_pad = _round_up(D_in, 128)
    if D_pad != D_in:
        # Fallback; prefer prepare_decoder_params() so this happens once, not per call.
        w2 = jnp.pad(w2, ((0, 0), (0, D_pad - D_in)))
        b2 = jnp.pad(b2, ((0, 0), (0, D_pad - D_in)))

    block_b, block_n, budget = _choose_tiles(B, H, D_pad, out_itemsize)
    B_pad = _round_up(B, block_b)
    if B_pad != B:
        x = jnp.pad(x, ((0, B_pad - B), (0, 0)))

    w1 = w1.astype(jnp.bfloat16)
    w2 = w2.astype(jnp.bfloat16)
    b1 = b1.astype(jnp.float32).reshape(1, H)
    b2 = b2.astype(jnp.float32).reshape(1, D_pad)

    nb, nd = B_pad // block_b, D_pad // block_n

    footprint = _footprint_bytes(block_b, block_n, H, D_pad, out_itemsize)
    vmem_limit = int(min(budget, max(32 << 20, 2 * footprint + (4 << 20))))

    # fc1 runs once per batch tile (thanks to the h scratch), fc2 over all columns.
    flops = 2 * B_pad * H * H + 2 * B_pad * H * D_pad
    w2_streams = nb if nd > 1 else 1          # W2 re-streams per batch tile only if column-tiled
    bytes_accessed = (B_pad * H * x.dtype.itemsize
                      + H * H * 2 + H * 4
                      + w2_streams * (H * D_pad * 2 + D_pad * 4)
                      + B_pad * D_pad * out_itemsize)

    out = pl.pallas_call(
        _decoder_kernel,
        out_shape=jax.ShapeDtypeStruct((B_pad, D_pad), out_dtype),
        grid_spec=pltpu.PrefetchScalarGridSpec(
            num_scalar_prefetch=0,
            grid=(nb, nd),
            in_specs=[
                pl.BlockSpec((block_b, H), lambda i, j: (i, 0)),            # x batch tile
                _block_spec((H, H), lambda i, j: (0, 0), single_buffer=True),   # W1 resident
                _block_spec((1, H), lambda i, j: (0, 0), single_buffer=True),   # b1 resident
                _block_spec((H, block_n), lambda i, j: (0, j),
                            single_buffer=(nd == 1)),                       # W2 column tile
                _block_spec((1, block_n), lambda i, j: (0, j),
                            single_buffer=(nd == 1)),                       # b2 column tile
            ],
            out_specs=pl.BlockSpec((block_b, block_n), lambda i, j: (i, j)),
            scratch_shapes=[pltpu.VMEM((block_b, H), jnp.bfloat16)],        # cached relu(fc1)
        ),
        compiler_params=pltpu.CompilerParams(
            dimension_semantics=("parallel", "arbitrary"),
            vmem_limit_bytes=vmem_limit,
        ),
        cost_estimate=pl.CostEstimate(
            flops=flops, transcendentals=0, bytes_accessed=bytes_accessed),
    )(x, w1, b1, w2, b2)

    return out[:B, :out_dim]


def prepare_decoder_params(w1, b1, w2, b2):
    """One-time (outside-jit) weight prep: bf16 cast + pad D to a multiple of
    128, so no per-call padding/copying of the weights is needed."""
    H = w1.shape[0]
    D = w2.shape[1]
    D_pad = _round_up(D, 128)
    b2 = b2.reshape(1, D)
    if D_pad != D:
        w2 = jnp.pad(w2, ((0, 0), (0, D_pad - D)))
        b2 = jnp.pad(b2, ((0, 0), (0, D_pad - D)))
    return (w1.astype(jnp.bfloat16), b1.astype(jnp.float32).reshape(1, H),
            w2.astype(jnp.bfloat16), b2.astype(jnp.float32), D)


def init_decoder_params(key, hidden_layer, input_shape):
    """PyTorch nn.Linear-style init: U(-1/sqrt(fan_in), 1/sqrt(fan_in))."""
    k1, k2, k3, k4 = jax.random.split(key, 4)
    bound = 1.0 / (hidden_layer ** 0.5)
    w1 = jax.random.uniform(k1, (hidden_layer, hidden_layer), jnp.float32,
                            minval=-bound, maxval=bound)
    b1 = jax.random.uniform(k2, (1, hidden_layer), jnp.float32,
                            minval=-bound, maxval=bound)
    w2 = jax.random.uniform(k3, (hidden_layer, input_shape), jnp.float32,
                            minval=-bound, maxval=bound)
    b2 = jax.random.uniform(k4, (1, input_shape), jnp.float32,
                            minval=-bound, maxval=bound)
    return w1, b1, w2, b2


if __name__ == "__main__":
    # Small shapes consistent with the module: hidden_layer=128, input_shape=256.
    B, HIDDEN, INPUT_SHAPE = 256, 128, 256

    key = jax.random.PRNGKey(0)
    kx, kp = jax.random.split(key)
    x = jax.random.normal(kx, (B, HIDDEN), jnp.float32)
    w1, b1, w2, b2 = init_decoder_params(kp, HIDDEN, INPUT_SHAPE)

    w1p, b1p, w2p, b2p, out_dim = prepare_decoder_params(w1, b1, w2, b2)
    out = decoder_forward(x, w1p, b1p, w2p, b2p, out_dim=out_dim)
    out = jax.block_until_ready(out)

    # Reference in plain JAX with the same precision recipe as the kernel
    # (bf16 MXU inputs, f32 accumulation, f32 bias add / ReLU).
    h_ref = jnp.maximum(
        jnp.dot(x.astype(jnp.bfloat16), w1p,
                preferred_element_type=jnp.float32) + b1p, 0.0)
    ref = jnp.dot(h_ref.astype(jnp.bfloat16), w2p,
                  preferred_element_type=jnp.float32) + b2p
    ref = ref[:, :out_dim]

    assert out.shape == (B, INPUT_SHAPE)
    assert out.dtype == jnp.float32
    assert jnp.allclose(out, ref, atol=2e-2, rtol=2e-2)

    print("KERNEL_OK")
</pallas_src>

<mosaic_0001>
module attributes {stable_mosaic.version = 11 : i64} {
  func.func @_decoder_kernel(%arg0: i32, %arg1: i32, %arg2: memref<256x128xf32, #tpu.memory_space<vmem>>, %arg3: memref<128x128xbf16, #tpu.memory_space<vmem>>, %arg4: memref<1x128xf32, #tpu.memory_space<vmem>>, %arg5: memref<128x256xbf16, #tpu.memory_space<vmem>>, %arg6: memref<1x256xf32, #tpu.memory_space<vmem>>, %arg7: memref<256x256xf32, #tpu.memory_space<vmem>>, %arg8: memref<256x128xbf16, #tpu.memory_space<vmem>>) attributes {dimension_semantics = [#tpu.dimension_semantics<parallel>, #tpu.dimension_semantics<arbitrary>], iteration_bounds = array<i64: 1, 1>, scalar_prefetch = 0 : i64, scratch_operands = 1 : i64, tpu.core_type = #tpu.core_type<tc>, window_params = [{transform_indices = @transform_0, window_bounds = array<i64: 256, 128>}, {pipeline_mode = #tpu.pipeline_mode<synchronous>, transform_indices = @transform_1, window_bounds = array<i64: 128, 128>}, {pipeline_mode = #tpu.pipeline_mode<synchronous>, transform_indices = @transform_2, window_bounds = array<i64: 1, 128>}, {pipeline_mode = #tpu.pipeline_mode<synchronous>, transform_indices = @transform_3, window_bounds = array<i64: 128, 256>}, {pipeline_mode = #tpu.pipeline_mode<synchronous>, transform_indices = @transform_4, window_bounds = array<i64: 1, 256>}, {transform_indices = @transform_5, window_bounds = array<i64: 256, 256>}]} {
    %c0_i32 = arith.constant 0 : i32
    %0 = arith.cmpi eq, %arg1, %c0_i32 : i32
    %1 = arith.extui %0 : i1 to i32
    %c0_i32_0 = arith.constant 0 : i32
    %2 = arith.cmpi ne, %1, %c0_i32_0 : i32
    scf.if %2 {
      %c0_8 = arith.constant 0 : index
      %c0_9 = arith.constant 0 : index
      %10 = vector.load %arg2[%c0_8, %c0_9] : memref<256x128xf32, #tpu.memory_space<vmem>>, vector<256x128xf32>
      %11 = arith.truncf %10 : vector<256x128xf32> to vector<256x128xbf16>
      %c0_10 = arith.constant 0 : index
      %c0_11 = arith.constant 0 : index
      %12 = vector.load %arg3[%c0_10, %c0_11] : memref<128x128xbf16, #tpu.memory_space<vmem>>, vector<128x128xbf16>
      %cst_12 = arith.constant dense<0.000000e+00> : vector<256x128xf32>
      %13 = tpu.matmul %11, %12, %cst_12 {dimension_numbers = #tpu.dot_dimension_numbers<[1], [0], [0], [1], [0, 0, 1, 1], [], []>} : vector<256x128xbf16>, vector<128x128xbf16>, vector<256x128xf32> -> vector<256x128xf32>
      %c0_13 = arith.constant 0 : index
      %c0_14 = arith.constant 0 : index
      %14 = vector.load %arg4[%c0_13, %c0_14] : memref<1x128xf32, #tpu.memory_space<vmem>>, vector<1x128xf32>
      %15 = vector.broadcast %14 : vector<1x128xf32> to vector<256x128xf32>
      %16 = arith.addf %13, %15 : vector<256x128xf32>
      %cst_15 = arith.constant 0.000000e+00 : f32
      %17 = vector.broadcast %cst_15 : f32 to vector<256x128xf32>
      %18 = arith.maximumf %16, %17 : vector<256x128xf32>
      %19 = arith.truncf %18 : vector<256x128xf32> to vector<256x128xbf16>
      %c0_16 = arith.constant 0 : index
      %c0_17 = arith.constant 0 : index
      %20 = vector.load %arg8[%c0_16, %c0_17] : memref<256x128xbf16, #tpu.memory_space<vmem>>, vector<256x128xbf16>
      tpu.vector_store %arg8[%c0_16, %c0_17], %19 {strides = array<i32>} : memref<256x128xbf16, #tpu.memory_space<vmem>>, vector<256x128xbf16>,
    } else {
    }
    %c0 = arith.constant 0 : index
    %c0_1 = arith.constant 0 : index
    %3 = vector.load %arg8[%c0, %c0_1] : memref<256x128xbf16, #tpu.memory_space<vmem>>, vector<256x128xbf16>
    %c0_2 = arith.constant 0 : index
    %c0_3 = arith.constant 0 : index
    %4 = vector.load %arg5[%c0_2, %c0_3] : memref<128x256xbf16, #tpu.memory_space<vmem>>, vector<128x256xbf16>
    %cst = arith.constant dense<0.000000e+00> : vector<256x256xf32>
    %5 = tpu.matmul %3, %4, %cst {dimension_numbers = #tpu.dot_dimension_numbers<[1], [0], [0], [1], [0, 0, 1, 1], [], []>} : vector<256x128xbf16>, vector<128x256xbf16>, vector<256x256xf32> -> vector<256x256xf32>
    %c0_4 = arith.constant 0 : index
    %c0_5 = arith.constant 0 : index
    %6 = vector.load %arg6[%c0_4, %c0_5] : memref<1x256xf32, #tpu.memory_space<vmem>>, vector<1x256xf32>
    %7 = vector.broadcast %6 : vector<1x256xf32> to vector<256x256xf32>
    %8 = arith.addf %5, %7 : vector<256x256xf32>
    %c0_6 = arith.constant 0 : index
    %c0_7 = arith.constant 0 : index
    %9 = vector.load %arg7[%c0_6, %c0_7] : memref<256x256xf32, #tpu.memory_space<vmem>>, vector<256x256xf32>
    tpu.vector_store %arg7[%c0_6, %c0_7], %8 {strides = array<i32>} : memref<256x256xf32, #tpu.memory_space<vmem>>, vector<256x256xf32>,
    return
  }
  func.func @transform_0(%arg0: i32, %arg1: i32) -> (i32, i32) {
    %c0_i32 = arith.constant 0 : i32
    %c0_i32_0 = arith.constant 0 : i32
    return %arg0, %c0_i32 : i32, i32
  }
  func.func @transform_1(%arg0: i32, %arg1: i32) -> (i32, i32) {
    %c0_i32 = arith.constant 0 : i32
    %c0_i32_0 = arith.constant 0 : i32
    %c0_i32_1 = arith.constant 0 : i32
    return %c0_i32, %c0_i32_0 : i32, i32
  }
  func.func @transform_2(%arg0: i32, %arg1: i32) -> (i32, i32) {
    %c0_i32 = arith.constant 0 : i32
    %c0_i32_0 = arith.constant 0 : i32
    %c0_i32_1 = arith.constant 0 : i32
    return %c0_i32, %c0_i32_0 : i32, i32
  }
  func.func @transform_3(%arg0: i32, %arg1: i32) -> (i32, i32) {
    %c0_i32 = arith.constant 0 : i32
    %c0_i32_0 = arith.constant 0 : i32
    return %c0_i32, %arg1 : i32, i32
  }
  func.func @transform_4(%arg0: i32, %arg1: i32) -> (i32, i32) {
    %c0_i32 = arith.constant 0 : i32
    %c0_i32_0 = arith.constant 0 : i32
    return %c0_i32, %arg1 : i32, i32
  }
  func.func @transform_5(%arg0: i32, %arg1: i32) -> (i32, i32) {
    %c0_i32 = arith.constant 0 : i32
    return %arg0, %arg1 : i32, i32
  }
}

</mosaic_0001>

<llo_original>
// kernel: decoder_forward.1
$region0: #{decoder_forward.1}
  #allocation0 [shape = 'u32[]', space=smem, size = 0x4, offset = 0x4, fixed_abs, tag = 'smem constant byte address 0x4 - core index']
  #allocation1 [shape = 'u32[144,128]{1,0:T(1,128)}', space=vmem, size = 0x12000, scoped, tag = 'internal scratch']
  #allocation2 [shape = 'bf16[256,128]{1,0:T(16,128)(2,1)}', space=vmem, size = 0x10000, scoped, tag = 'scratch operand']
  %s0 = inlined_call_operand.hbm [shape: f32[256,128], index: 0, kind: input, shape index: {}]
  %s1 = inlined_call_operand.hbm [shape: bf16[128,128], index: 1, kind: input, shape index: {}]
  %s2 = inlined_call_operand.vmem [shape: f32[1,128], index: 2, kind: input, shape index: {}]
  %s3 = inlined_call_operand.hbm [shape: bf16[128,256], index: 3, kind: input, shape index: {}]
  %s4 = inlined_call_operand.vmem [shape: f32[1,256], index: 4, kind: input, shape index: {}]
  %s5 = inlined_call_operand.hbm [shape: f32[256,256], index: 5, kind: output, shape index: {}]
  %s6 = sld [smem:[#allocation0]]
  $region46: #{decoder_forward.1} parent=0
    _
  %s8 = ssub.s32 1, %s6
  %s9 = scalar_select 0, %s8, %s6
  $region1: #{decoder_forward.1} parent=0
    #allocation3 [shape = 'u8[131072]{0}', space=vmem, size = 0x20000, scoped, tag = 'input window, operand 0, single buffered']
    #allocation4 [shape = 's32[1]{0}', space=sflag, size = 0x4, scoped, tag = 'scoped memory for decoder_forward.1']
    #allocation5 [shape = 's32[1]{0}', space=sflag, size = 0x4, scoped, tag = 'scoped memory for decoder_forward.1']
    #allocation6 [shape = 'u8[32768]{0}', space=vmem, size = 0x8000, scoped, tag = 'input window, operand 1, single buffered']
    #allocation7 [shape = 's32[1]{0}', space=sflag, size = 0x4, scoped, tag = 'scoped memory for decoder_forward.1']
    #allocation8 [shape = 'u8[65536]{0}', space=vmem, size = 0x10000, scoped, tag = 'input window, operand 3, single buffered']
    #allocation9 [shape = 'u8[262144]{0}', space=vmem, size = 0x40000, scoped, tag = 'output window, operand 0, single buffered']
    %10 = vsyncpa [#allocation4], 0
    %11 = vsyncpa [#allocation7], 0
    %12 = vsyncpa [#allocation5], 0
    // Predicated region
    $region2: #{decoder_forward.1} parent=1 // pred_check
      _
    $region3: #{decoder_forward.1} parent=1 // pred_check_branch
      %14 = sbr.rel (0) target = $region5
    $region4: #{decoder_forward.1} parent=1 // pred_region
      %s16 = ssub.s32 4096, 4096
      %17 = vsyncadd [#allocation4], %s16
      %s18 = sshll.u32 [#allocation3], 4
      %s19 = int_to_ptr.vmem [resolvable:$true] %s18
      %24 = dma.hbm_to_vmem [thread:$0]  %s0, 4096, %s19, [#allocation4], 128, 128, 8
    $region5: #{decoder_forward.1} parent=1 // pred_fallthru
      _
    // Predicated region
    $region6: #{decoder_forward.1} parent=1 // pred_check
      _
    $region7: #{decoder_forward.1} parent=1 // pred_check_branch
      %26 = sbr.rel (0) target = $region9
    $region8: #{decoder_forward.1} parent=1 // pred_region
      %s28 = ssub.s32 1024, 1024
      %29 = vsyncadd [#allocation7], %s28
      %s30 = sshll.u32 [#allocation6], 4
      %s31 = int_to_ptr.vmem [resolvable:$true] %s30
      %36 = dma.hbm_to_vmem [thread:$0]  %s1, 1024, %s31, [#allocation7], 64, 64, 4
    $region9: #{decoder_forward.1} parent=1 // pred_fallthru
      _
    // Predicated region
    $region10: #{decoder_forward.1} parent=1 // pred_check
      _
    $region11: #{decoder_forward.1} parent=1 // pred_check_branch
      %38 = sbr.rel (0) target = $region13
    $region12: #{decoder_forward.1} parent=1 // pred_region
      _
    $region13: #{decoder_forward.1} parent=1 // pred_fallthru
      _
    // Predicated region
    $region14: #{decoder_forward.1} parent=1 // pred_check
      _
    $region15: #{decoder_forward.1} parent=1 // pred_check_branch
      %40 = sbr.rel (0) target = $region17
    $region16: #{decoder_forward.1} parent=1 // pred_region
      %s42 = ssub.s32 2048, 2048
      %43 = vsyncadd [#allocation7], %s42
      %s44 = sshll.u32 [#allocation8], 4
      %s45 = int_to_ptr.vmem [resolvable:$true] %s44
      %50 = dma.hbm_to_vmem [thread:$0]  %s3, 2048, %s45, [#allocation7], 128, 128, 8
    $region17: #{decoder_forward.1} parent=1 // pred_fallthru
      _
    // Predicated region
    $region18: #{decoder_forward.1} parent=1 // pred_check
      _
    $region19: #{decoder_forward.1} parent=1 // pred_check_branch
      %52 = sbr.rel (0) target = $region21
    $region20: #{decoder_forward.1} parent=1 // pred_region
      _
    $region21: #{decoder_forward.1} parent=1 // pred_fallthru
      _
    // Predicated region
    $region22: #{decoder_forward.1} parent=1 // pred_check
      _
    $region23: #{decoder_forward.1} parent=1 // pred_check_branch
      %54 = sbr.rel (0) target = $region25
    $region24: #{decoder_forward.1} parent=1 // pred_region
      %55 = dma.done [#allocation4], 4096
    $region25: #{decoder_forward.1} parent=1 // pred_fallthru
      _
    // Predicated region
    $region26: #{decoder_forward.1} parent=1 // pred_check
      _
    $region27: #{decoder_forward.1} parent=1 // pred_check_branch
      %57 = sbr.rel (0) target = $region29
    $region28: #{decoder_forward.1} parent=1 // pred_region
      %58 = dma.done [#allocation7], 1024
    $region29: #{decoder_forward.1} parent=1 // pred_fallthru
      _
    // Predicated region
    $region30: #{decoder_forward.1} parent=1 // pred_check
      _
    $region31: #{decoder_forward.1} parent=1 // pred_check_branch
      %60 = sbr.rel (0) target = $region33
    $region32: #{decoder_forward.1} parent=1 // pred_region
      %61 = dma.done [#allocation7], 2048
    $region33: #{decoder_forward.1} parent=1 // pred_fallthru
      _
    %p63 = scmp.eq.s32.totalorder 0, 0
    // Predicated region
    $region34: #{decoder_forward.1} parent=1 // pred_check
      %p64 = pneg %p63
    $region35: #{decoder_forward.1} parent=1 // pred_check_branch
      %66 = sbr.rel (%p64) target = $region37
    $region36: #{decoder_forward.1} parent=1 // pred_region
      %v67 = vld [vmem:[#allocation3] sm:$0xff]
      %v68 = vld [vmem:[#allocation3 + $0x8] sm:$0xff]
      %v69 = vld [vmem:[#allocation3 + $0x10] sm:$0xff]
      %v70 = vld [vmem:[#allocation3 + $0x18] sm:$0xff]
      %v71 = vld [vmem:[#allocation3 + $0x20] sm:$0xff]
      %v72 = vld [vmem:[#allocation3 + $0x28] sm:$0xff]
      %v73 = vld [vmem:[#allocation3 + $0x30] sm:$0xff]
      %v74 = vld [vmem:[#allocation3 + $0x38] sm:$0xff]
      %v75 = vld [vmem:[#allocation3 + $0x40] sm:$0xff]
      %v76 = vld [vmem:[#allocation3 + $0x48] sm:$0xff]
      %v77 = vld [vmem:[#allocation3 + $0x50] sm:$0xff]
      %v78 = vld [vmem:[#allocation3 + $0x58] sm:$0xff]
      %v79 = vld [vmem:[#allocation3 + $0x60] sm:$0xff]
      %v80 = vld [vmem:[#allocation3 + $0x68] sm:$0xff]
      %v81 = vld [vmem:[#allocation3 + $0x70] sm:$0xff]
      %v82 = vld [vmem:[#allocation3 + $0x78] sm:$0xff]
      %v83 = vld [vmem:[#allocation3 + $0x80] sm:$0xff]
      %v84 = vld [vmem:[#allocation3 + $0x88] sm:$0xff]
      %v85 = vld [vmem:[#allocation3 + $0x90] sm:$0xff]
      %v86 = vld [vmem:[#allocation3 + $0x98] sm:$0xff]
      %v87 = vld [vmem:[#allocation3 + $0xa0] sm:$0xff]
      %v88 = vld [vmem:[#allocation3 + $0xa8] sm:$0xff]
      %v89 = vld [vmem:[#allocation3 + $0xb0] sm:$0xff]
      %v90 = vld [vmem:[#allocation3 + $0xb8] sm:$0xff]
      %v91 = vld [vmem:[#allocation3 + $0xc0] sm:$0xff]
      %v92 = vld [vmem:[#allocation3 + $0xc8] sm:$0xff]
      %v93 = vld [vmem:[#allocation3 + $0xd0] sm:$0xff]
      %v94 = vld [vmem:[#allocation3 + $0xd8] sm:$0xff]
      %v95 = vld [vmem:[#allocation3 + $0xe0] sm:$0xff]
      %v96 = vld [vmem:[#allocation3 + $0xe8] sm:$0xff]
      %v97 = vld [vmem:[#allocation3 + $0xf0] sm:$0xff]
      %v98 = vld [vmem:[#allocation3 + $0xf8] sm:$0xff]
      %v99 = vpack.c.bf16 %v68, %v67
      %v100 = vpack.c.bf16 %v70, %v69
      %v101 = vpack.c.bf16 %v72, %v71
      %v102 = vpack.c.bf16 %v74, %v73
      %v103 = vpack.c.bf16 %v76, %v75
      %v104 = vpack.c.bf16 %v78, %v77
      %v105 = vpack.c.bf16 %v80, %v79
      %v106 = vpack.c.bf16 %v82, %v81
      %v107 = vpack.c.bf16 %v84, %v83
      %v108 = vpack.c.bf16 %v86, %v85
      %v109 = vpack.c.bf16 %v88, %v87
      %v110 = vpack.c.bf16 %v90, %v89
      %v111 = vpack.c.bf16 %v92, %v91
      %v112 = vpack.c.bf16 %v94, %v93
      %v113 = vpack.c.bf16 %v96, %v95
      %v114 = vpack.c.bf16 %v98, %v97
      %v115 = vld [vmem:[#allocation6] sm:$0xf]
      %v116 = vld [vmem:[#allocation6 + $0x4] sm:$0xf]
      %v117 = vld [vmem:[#allocation6 + $0x8] sm:$0xf]
      %v118 = vld [vmem:[#allocation6 + $0xc] sm:$0xf]
      %v119 = vld [vmem:[#allocation6 + $0x10] sm:$0xf]
      %v120 = vld [vmem:[#allocation6 + $0x14] sm:$0xf]
      %v121 = vld [vmem:[#allocation6 + $0x18] sm:$0xf]
      %v122 = vld [vmem:[#allocation6 + $0x1c] sm:$0xf]
      %v123 = vld [vmem:[#allocation6 + $0x20] sm:$0xf]
      %v124 = vld [vmem:[#allocation6 + $0x24] sm:$0xf]
      %v125 = vld [vmem:[#allocation6 + $0x28] sm:$0xf]
      %v126 = vld [vmem:[#allocation6 + $0x2c] sm:$0xf]
      %v127 = vld [vmem:[#allocation6 + $0x30] sm:$0xf]
      %v128 = vld [vmem:[#allocation6 + $0x34] sm:$0xf]
      %v129 = vld [vmem:[#allocation6 + $0x38] sm:$0xf]
      %v130 = vld [vmem:[#allocation6 + $0x3c] sm:$0xf]
      %v131 = vld [vmem:[%s2] sm:$0x1]
      %v133 = vlaneseq
      %v134 = vshrl.u32 %v133, 7
      %v135 = vsub.s32 0, %v134
      %v136 = vrot.slane %v131, %v135
      %v154 = vunpack.c.l.b16 %v115
      %v155 = vunpack.c.l.b16 %v116
      %v156 = vunpack.c.l.b16 %v117
      %v157 = vunpack.c.l.b16 %v118
      %v158 = vunpack.c.l.b16 %v119
      %v159 = vunpack.c.l.b16 %v120
      %v160 = vunpack.c.l.b16 %v121
      %v161 = vunpack.c.l.b16 %v122
      %v162 = vunpack.c.l.b16 %v123
      %v163 = vunpack.c.l.b16 %v124
      %v164 = vunpack.c.l.b16 %v125
      %v165 = vunpack.c.l.b16 %v126
      %v166 = vunpack.c.l.b16 %v127
      %v167 = vunpack.c.l.b16 %v128
      %v168 = vunpack.c.l.b16 %v129
      %v169 = vunpack.c.l.b16 %v130
      %v170 = vpack.c.b16 %v155, %v154
      %v171 = vpack.c.b16 %v157, %v156
      %v172 = vpack.c.b16 %v159, %v158
      %v173 = vpack.c.b16 %v161, %v160
      %v174 = vpack.c.b16 %v163, %v162
      %v175 = vpack.c.b16 %v165, %v164
      %v176 = vpack.c.b16 %v167, %v166
      %v177 = vpack.c.b16 %v169, %v168
      %186 = vmatprep.subr.bf16.mxu0 0
      %187 = vmatpush1.bf16.msra.mxu0 %v170
      %188 = vmatprep.subr.bf16.mxu0 0
      %189 = vmatpush1.bf16.msra.mxu0 %v171
      %190 = vmatprep.subr.bf16.mxu0 0
      %191 = vmatpush1.bf16.msra.mxu0 %v172
      %192 = vmatprep.subr.bf16.mxu0 0
      %193 = vmatpush1.bf16.msra.mxu0 %v173
      %194 = vmatprep.subr.bf16.mxu0 0
      %195 = vmatpush1.bf16.msra.mxu0 %v174
      %196 = vmatprep.subr.bf16.mxu0 0
      %197 = vmatpush1.bf16.msra.mxu0 %v175
      %198 = vmatprep.subr.bf16.mxu0 0
      %199 = vmatpush1.bf16.msra.mxu0 %v176
      %200 = vmatprep.subr.bf16.mxu0 0
      %201 = vmatpush1.bf16.msra.mxu0 %v177
      %202 = vmatprep.subr.bf16.mxu0 0
      %203 = vmatpush1.bf16.msra.mxu0 0
      %204 = vmatprep.subr.bf16.mxu0 0
      %205 = vmatpush1.bf16.msra.mxu0 0
      %206 = vmatprep.subr.bf16.mxu0 0
      %207 = vmatpush1.bf16.msra.mxu0 0
      %208 = vmatprep.subr.bf16.mxu0 0
      %209 = vmatpush1.bf16.msra.mxu0 0
      %210 = vmatprep.subr.bf16.mxu0 0
      %211 = vmatpush1.bf16.msra.mxu0 0
      %212 = vmatprep.subr.bf16.mxu0 0
      %213 = vmatpush1.bf16.msra.mxu0 0
      %214 = vmatprep.subr.bf16.mxu0 0
      %215 = vmatpush1.bf16.msra.mxu0 0
      %216 = vmatprep.subr.bf16.mxu0 0
      %217 = vmatpush1.bf16.msra.mxu0 0
      %218 = vmatprep.mubr.bf16.mxu0 0
      %219 = vmatmul.mubr.bf16.gmra.mrb[0].mxu0 %v99
      %v220 = vpop.f32.mrb[0].mxu0
      %v221 = vadd.f32 %v136, %v220
      %v222 = vpop.f32.mrb[0].mxu0
      %v223 = vpop.f32.mrb[0].mxu0
      %v224 = vadd.f32 %v136, %v223
      %v225 = vpop.f32.mrb[0].mxu0
      %226 = vmatprep.mubr.bf16.mxu0 0
      %227 = vmatmul.mubr.bf16.gmra.mrb[0].mxu0 %v100
      %v228 = vpop.f32.mrb[0].mxu0
      %v229 = vadd.f32 %v136, %v228
      %v230 = vpop.f32.mrb[0].mxu0
      %v231 = vpop.f32.mrb[0].mxu0
      %v232 = vadd.f32 %v136, %v231
      %v233 = vpop.f32.mrb[0].mxu0
      %234 = vmatprep.mubr.bf16.mxu0 0
      %235 = vmatmul.mubr.bf16.gmra.mrb[0].mxu0 %v101
      %v236 = vpop.f32.mrb[0].mxu0
      %v237 = vadd.f32 %v136, %v236
      %v238 = vpop.f32.mrb[0].mxu0
      %v239 = vpop.f32.mrb[0].mxu0
      %v240 = vadd.f32 %v136, %v239
      %v241 = vpop.f32.mrb[0].mxu0
      %242 = vmatprep.mubr.bf16.mxu0 0
      %243 = vmatmul.mubr.bf16.gmra.mrb[0].mxu0 %v102
      %v244 = vpop.f32.mrb[0].mxu0
      %v245 = vadd.f32 %v136, %v244
      %v246 = vpop.f32.mrb[0].mxu0
      %v247 = vpop.f32.mrb[0].mxu0
      %v248 = vadd.f32 %v136, %v247
      %v249 = vpop.f32.mrb[0].mxu0
      %250 = vmatprep.mubr.bf16.mxu0 0
      %251 = vmatmul.mubr.bf16.gmra.mrb[0].mxu0 %v103
      %v252 = vpop.f32.mrb[0].mxu0
      %v253 = vadd.f32 %v136, %v252
      %v254 = vpop.f32.mrb[0].mxu0
      %v255 = vpop.f32.mrb[0].mxu0
      %v256 = vadd.f32 %v136, %v255
      %v257 = vpop.f32.mrb[0].mxu0
      %258 = vmatprep.mubr.bf16.mxu0 0
      %259 = vmatmul.mubr.bf16.gmra.mrb[0].mxu0 %v104
      %v260 = vpop.f32.mrb[0].mxu0
      %v261 = vadd.f32 %v136, %v260
      %v262 = vpop.f32.mrb[0].mxu0
      %v263 = vpop.f32.mrb[0].mxu0
      %v264 = vadd.f32 %v136, %v263
      %v265 = vpop.f32.mrb[0].mxu0
      %266 = vmatprep.mubr.bf16.mxu0 0
      %267 = vmatmul.mubr.bf16.gmra.mrb[0].mxu0 %v105
      %v268 = vpop.f32.mrb[0].mxu0
      %v269 = vadd.f32 %v136, %v268
      %v270 = vpop.f32.mrb[0].mxu0
      %v271 = vpop.f32.mrb[0].mxu0
      %v272 = vadd.f32 %v136, %v271
      %v273 = vpop.f32.mrb[0].mxu0
      %274 = vmatprep.mubr.bf16.mxu0 0
      %275 = vmatmul.mubr.bf16.gmra.mrb[0].mxu0 %v106
      %v276 = vpop.f32.mrb[0].mxu0
      %v277 = vadd.f32 %v136, %v276
      %v278 = vpop.f32.mrb[0].mxu0
      %v279 = vpop.f32.mrb[0].mxu0
      %v280 = vadd.f32 %v136, %v279
      %v281 = vpop.f32.mrb[0].mxu0
      %282 = vmatprep.mubr.bf16.mxu0 0
      %283 = vmatmul.mubr.bf16.gmra.mrb[0].mxu0 %v107
      %v284 = vpop.f32.mrb[0].mxu0
      %v285 = vadd.f32 %v136, %v284
      %v286 = vpop.f32.mrb[0].mxu0
      %v287 = vpop.f32.mrb[0].mxu0
      %v288 = vadd.f32 %v136, %v287
      %v289 = vpop.f32.mrb[0].mxu0
      %290 = vmatprep.mubr.bf16.mxu0 0
      %291 = vmatmul.mubr.bf16.gmra.mrb[0].mxu0 %v108
      %v292 = vpop.f32.mrb[0].mxu0
      %v293 = vadd.f32 %v136, %v292
      %v294 = vpop.f32.mrb[0].mxu0
      %v295 = vpop.f32.mrb[0].mxu0
      %v296 = vadd.f32 %v136, %v295
      %v297 = vpop.f32.mrb[0].mxu0
      %298 = vmatprep.mubr.bf16.mxu0 0
      %299 = vmatmul.mubr.bf16.gmra.mrb[0].mxu0 %v109
      %v300 = vpop.f32.mrb[0].mxu0
      %v301 = vadd.f32 %v136, %v300
      %v302 = vpop.f32.mrb[0].mxu0
      %v303 = vpop.f32.mrb[0].mxu0
      %v304 = vadd.f32 %v136, %v303
      %v305 = vpop.f32.mrb[0].mxu0
      %306 = vmatprep.mubr.bf16.mxu0 0
      %307 = vmatmul.mubr.bf16.gmra.mrb[0].mxu0 %v110
      %v308 = vpop.f32.mrb[0].mxu0
      %v309 = vadd.f32 %v136, %v308
      %v310 = vpop.f32.mrb[0].mxu0
      %v311 = vpop.f32.mrb[0].mxu0
      %v312 = vadd.f32 %v136, %v311
      %v313 = vpop.f32.mrb[0].mxu0
      %314 = vmatprep.mubr.bf16.mxu0 0
      %315 = vmatmul.mubr.bf16.gmra.mrb[0].mxu0 %v111
      %v316 = vpop.f32.mrb[0].mxu0
      %v317 = vadd.f32 %v136, %v316
      %v318 = vpop.f32.mrb[0].mxu0
      %v319 = vpop.f32.mrb[0].mxu0
      %v320 = vadd.f32 %v136, %v319
      %v321 = vpop.f32.mrb[0].mxu0
      %322 = vmatprep.mubr.bf16.mxu0 0
      %323 = vmatmul.mubr.bf16.gmra.mrb[0].mxu0 %v112
      %v324 = vpop.f32.mrb[0].mxu0
      %v325 = vadd.f32 %v136, %v324
      %v326 = vpop.f32.mrb[0].mxu0
      %v327 = vpop.f32.mrb[0].mxu0
      %v328 = vadd.f32 %v136, %v327
      %v329 = vpop.f32.mrb[0].mxu0
      %330 = vmatprep.mubr.bf16.mxu0 0
      %331 = vmatmul.mubr.bf16.gmra.mrb[0].mxu0 %v113
      %v332 = vpop.f32.mrb[0].mxu0
      %v333 = vadd.f32 %v136, %v332
      %v334 = vpop.f32.mrb[0].mxu0
      %v335 = vpop.f32.mrb[0].mxu0
      %v336 = vadd.f32 %v136, %v335
      %v337 = vpop.f32.mrb[0].mxu0
      %338 = vmatprep.mubr.bf16.mxu0 0
      %339 = vmatmul.mubr.bf16.gmra.mrb[0].mxu0 %v114
      %v340 = vpop.f32.mrb[0].mxu0
      %v341 = vadd.f32 %v136, %v340
      %v342 = vpop.f32.mrb[0].mxu0
      %v343 = vpop.f32.mrb[0].mxu0
      %v344 = vadd.f32 %v136, %v343
      %v345 = vpop.f32.mrb[0].mxu0
      %346 = vdwg.mxu0
      %v347 = vmax.f32 %v221, 0.0
      %v348 = vmax.f32 %v224, 0.0
      %v349 = vmax.f32 %v229, 0.0
      %v350 = vmax.f32 %v232, 0.0
      %v351 = vmax.f32 %v237, 0.0
      %v352 = vmax.f32 %v240, 0.0
      %v353 = vmax.f32 %v245, 0.0
      %v354 = vmax.f32 %v248, 0.0
      %v355 = vmax.f32 %v253, 0.0
      %v356 = vmax.f32 %v256, 0.0
      %v357 = vmax.f32 %v261, 0.0
      %v358 = vmax.f32 %v264, 0.0
      %v359 = vmax.f32 %v269, 0.0
      %v360 = vmax.f32 %v272, 0.0
      %v361 = vmax.f32 %v277, 0.0
      %v362 = vmax.f32 %v280, 0.0
      %v363 = vmax.f32 %v285, 0.0
      %v364 = vmax.f32 %v288, 0.0
      %v365 = vmax.f32 %v293, 0.0
      %v366 = vmax.f32 %v296, 0.0
      %v367 = vmax.f32 %v301, 0.0
      %v368 = vmax.f32 %v304, 0.0
      %v369 = vmax.f32 %v309, 0.0
      %v370 = vmax.f32 %v312, 0.0
      %v371 = vmax.f32 %v317, 0.0
      %v372 = vmax.f32 %v320, 0.0
      %v373 = vmax.f32 %v325, 0.0
      %v374 = vmax.f32 %v328, 0.0
      %v375 = vmax.f32 %v333, 0.0
      %v376 = vmax.f32 %v336, 0.0
      %v377 = vmax.f32 %v341, 0.0
      %v378 = vmax.f32 %v344, 0.0
      %v379 = vpack.c.bf16 %v348, %v347
      %v380 = vpack.c.bf16 %v350, %v349
      %v381 = vpack.c.bf16 %v352, %v351
      %v382 = vpack.c.bf16 %v354, %v353
      %v383 = vpack.c.bf16 %v356, %v355
      %v384 = vpack.c.bf16 %v358, %v357
      %v385 = vpack.c.bf16 %v360, %v359
      %v386 = vpack.c.bf16 %v362, %v361
      %v387 = vpack.c.bf16 %v364, %v363
      %v388 = vpack.c.bf16 %v366, %v365
      %v389 = vpack.c.bf16 %v368, %v367
      %v390 = vpack.c.bf16 %v370, %v369
      %v391 = vpack.c.bf16 %v372, %v371
      %v392 = vpack.c.bf16 %v374, %v373
      %v393 = vpack.c.bf16 %v376, %v375
      %v394 = vpack.c.bf16 %v378, %v377
      %395 = vst [vmem:[#allocation2] sm:$0xff] %v379
      %396 = vst [vmem:[#allocation2 + $0x8] sm:$0xff] %v380
      %397 = vst [vmem:[#allocation2 + $0x10] sm:$0xff] %v381
      %398 = vst [vmem:[#allocation2 + $0x18] sm:$0xff] %v382
      %399 = vst [vmem:[#allocation2 + $0x20] sm:$0xff] %v383
      %400 = vst [vmem:[#allocation2 + $0x28] sm:$0xff] %v384
      %401 = vst [vmem:[#allocation2 + $0x30] sm:$0xff] %v385
      %402 = vst [vmem:[#allocation2 + $0x38] sm:$0xff] %v386
      %403 = vst [vmem:[#allocation2 + $0x40] sm:$0xff] %v387
      %404 = vst [vmem:[#allocation2 + $0x48] sm:$0xff] %v388
      %405 = vst [vmem:[#allocation2 + $0x50] sm:$0xff] %v389
      %406 = vst [vmem:[#allocation2 + $0x58] sm:$0xff] %v390
      %407 = vst [vmem:[#allocation2 + $0x60] sm:$0xff] %v391
      %408 = vst [vmem:[#allocation2 + $0x68] sm:$0xff] %v392
      %409 = vst [vmem:[#allocation2 + $0x70] sm:$0xff] %v393
      %410 = vst [vmem:[#allocation2 + $0x78] sm:$0xff] %v394
    $region37: #{decoder_forward.1} parent=1 // pred_fallthru
      _
    %v411 = vld [vmem:[#allocation2] sm:$0xff]
    %v412 = vld [vmem:[#allocation2 + $0x8] sm:$0xff]
    %v413 = vld [vmem:[#allocation2 + $0x10] sm:$0xff]
    %v414 = vld [vmem:[#allocation2 + $0x18] sm:$0xff]
    %v415 = vld [vmem:[#allocation2 + $0x20] sm:$0xff]
    %v416 = vld [vmem:[#allocation2 + $0x28] sm:$0xff]
    %v417 = vld [vmem:[#allocation2 + $0x30] sm:$0xff]
    %v418 = vld [vmem:[#allocation2 + $0x38] sm:$0xff]
    %v419 = vld [vmem:[#allocation2 + $0x40] sm:$0xff]
    %v420 = vld [vmem:[#allocation2 + $0x48] sm:$0xff]
    %v421 = vld [vmem:[#allocation2 + $0x50] sm:$0xff]
    %v422 = vld [vmem:[#allocation2 + $0x58] sm:$0xff]
    %v423 = vld [vmem:[#allocation2 + $0x60] sm:$0xff]
    %v424 = vld [vmem:[#allocation2 + $0x68] sm:$0xff]
    %v425 = vld [vmem:[#allocation2 + $0x70] sm:$0xff]
    %v426 = vld [vmem:[#allocation2 + $0x78] sm:$0xff]
    %v427 = vld [vmem:[#allocation8] sm:$0xff]
    %v428 = vld [vmem:[#allocation8 + $0x8] sm:$0xff]
    %v429 = vld [vmem:[#allocation8 + $0x10] sm:$0xff]
    %v430 = vld [vmem:[#allocation8 + $0x18] sm:$0xff]
    %v431 = vld [vmem:[#allocation8 + $0x20] sm:$0xff]
    %v432 = vld [vmem:[#allocation8 + $0x28] sm:$0xff]
    %v433 = vld [vmem:[#allocation8 + $0x30] sm:$0xff]
    %v434 = vld [vmem:[#allocation8 + $0x38] sm:$0xff]
    %v435 = vld [vmem:[#allocation8 + $0x40] sm:$0xff]
    %v436 = vld [vmem:[#allocation8 + $0x48] sm:$0xff]
    %v437 = vld [vmem:[#allocation8 + $0x50] sm:$0xff]
    %v438 = vld [vmem:[#allocation8 + $0x58] sm:$0xff]
    %v439 = vld [vmem:[#allocation8 + $0x60] sm:$0xff]
    %v440 = vld [vmem:[#allocation8 + $0x68] sm:$0xff]
    %v441 = vld [vmem:[#allocation8 + $0x70] sm:$0xff]
    %v442 = vld [vmem:[#allocation8 + $0x78] sm:$0xff]
    %v443 = vld [vmem:[%s4] sm:$0x3]
    %v445 = vlaneseq
    %v446 = vshrl.u32 %v445, 7
    %v447 = vsub.s32 0, %v446
    %v448 = vrot.slane %v443, %v447
    %v449 = vlaneseq
    %v450 = vshrl.u32 %v449, 7
    %v451 = vsub.s32 1, %v450
    %v452 = vrot.slane %v443, %v451
    %v471 = vunpack.c.l.b16 %v427
    %v472 = vunpack.c.h.b16 %v427
    %v473 = vunpack.c.l.b16 %v428
    %v474 = vunpack.c.h.b16 %v428
    %v475 = vunpack.c.l.b16 %v429
    %v476 = vunpack.c.h.b16 %v429
    %v477 = vunpack.c.l.b16 %v430
    %v478 = vunpack.c.h.b16 %v430
    %v479 = vunpack.c.l.b16 %v431
    %v480 = vunpack.c.h.b16 %v431
    %v481 = vunpack.c.l.b16 %v432
    %v482 = vunpack.c.h.b16 %v432
    %v483 = vunpack.c.l.b16 %v433
    %v484 = vunpack.c.h.b16 %v433
    %v485 = vunpack.c.l.b16 %v434
    %v486 = vunpack.c.h.b16 %v434
    %v487 = vunpack.c.l.b16 %v435
    %v488 = vunpack.c.h.b16 %v435
    %v489 = vunpack.c.l.b16 %v436
    %v490 = vunpack.c.h.b16 %v436
    %v491 = vunpack.c.l.b16 %v437
    %v492 = vunpack.c.h.b16 %v437
    %v493 = vunpack.c.l.b16 %v438
    %v494 = vunpack.c.h.b16 %v438
    %v495 = vunpack.c.l.b16 %v439
    %v496 = vunpack.c.h.b16 %v439
    %v497 = vunpack.c.l.b16 %v440
    %v498 = vunpack.c.h.b16 %v440
    %v499 = vunpack.c.l.b16 %v441
    %v500 = vunpack.c.h.b16 %v441
    %v501 = vunpack.c.l.b16 %v442
    %v502 = vunpack.c.h.b16 %v442
    %v503 = vpack.c.b16 %v473, %v471
    %v504 = vpack.c.b16 %v474, %v472
    %v505 = vpack.c.b16 %v477, %v475
    %v506 = vpack.c.b16 %v478, %v476
    %v507 = vpack.c.b16 %v481, %v479
    %v508 = vpack.c.b16 %v482, %v480
    %v509 = vpack.c.b16 %v485, %v483
    %v510 = vpack.c.b16 %v486, %v484
    %v511 = vpack.c.b16 %v489, %v487
    %v512 = vpack.c.b16 %v490, %v488
    %v513 = vpack.c.b16 %v493, %v491
    %v514 = vpack.c.b16 %v494, %v492
    %v515 = vpack.c.b16 %v497, %v495
    %v516 = vpack.c.b16 %v498, %v496
    %v517 = vpack.c.b16 %v501, %v499
    %v518 = vpack.c.b16 %v502, %v500
    %535 = vmatprep.subr.bf16.mxu0 %v504
    %536 = vmatpush1.bf16.msra.mxu0 %v503
    %537 = vmatprep.subr.bf16.mxu0 %v506
    %538 = vmatpush1.bf16.msra.mxu0 %v505
    %539 = vmatprep.subr.bf16.mxu0 %v508
    %540 = vmatpush1.bf16.msra.mxu0 %v507
    %541 = vmatprep.subr.bf16.mxu0 %v510
    %542 = vmatpush1.bf16.msra.mxu0 %v509
    %543 = vmatprep.subr.bf16.mxu0 %v512
    %544 = vmatpush1.bf16.msra.mxu0 %v511
    %545 = vmatprep.subr.bf16.mxu0 %v514
    %546 = vmatpush1.bf16.msra.mxu0 %v513
    %547 = vmatprep.subr.bf16.mxu0 %v516
    %548 = vmatpush1.bf16.msra.mxu0 %v515
    %549 = vmatprep.subr.bf16.mxu0 %v518
    %550 = vmatpush1.bf16.msra.mxu0 %v517
    %551 = vmatprep.subr.bf16.mxu0 0
    %552 = vmatpush1.bf16.msra.mxu0 0
    %553 = vmatprep.subr.bf16.mxu0 0
    %554 = vmatpush1.bf16.msra.mxu0 0
    %555 = vmatprep.subr.bf16.mxu0 0
    %556 = vmatpush1.bf16.msra.mxu0 0
    %557 = vmatprep.subr.bf16.mxu0 0
    %558 = vmatpush1.bf16.msra.mxu0 0
    %559 = vmatprep.subr.bf16.mxu0 0
    %560 = vmatpush1.bf16.msra.mxu0 0
    %561 = vmatprep.subr.bf16.mxu0 0
    %562 = vmatpush1.bf16.msra.mxu0 0
    %563 = vmatprep.subr.bf16.mxu0 0
    %564 = vmatpush1.bf16.msra.mxu0 0
    %565 = vmatprep.subr.bf16.mxu0 0
    %566 = vmatpush1.bf16.msra.mxu0 0
    %567 = vmatprep.mubr.bf16.mxu0 0
    %568 = vmatmul.mubr.bf16.gmra.mrb[0].mxu0 %v411
    %v569 = vpop.f32.mrb[0].mxu0
    %v570 = vadd.f32 %v448, %v569
    %v571 = vpop.f32.mrb[0].mxu0
    %v572 = vadd.f32 %v452, %v571
    %v573 = vpop.f32.mrb[0].mxu0
    %v574 = vadd.f32 %v448, %v573
    %v575 = vpop.f32.mrb[0].mxu0
    %v576 = vadd.f32 %v452, %v575
    %577 = vmatprep.mubr.bf16.mxu0 0
    %578 = vmatmul.mubr.bf16.gmra.mrb[0].mxu0 %v412
    %v579 = vpop.f32.mrb[0].mxu0
    %v580 = vadd.f32 %v448, %v579
    %v581 = vpop.f32.mrb[0].mxu0
    %v582 = vadd.f32 %v452, %v581
    %v583 = vpop.f32.mrb[0].mxu0
    %v584 = vadd.f32 %v448, %v583
    %v585 = vpop.f32.mrb[0].mxu0
    %v586 = vadd.f32 %v452, %v585
    %587 = vmatprep.mubr.bf16.mxu0 0
    %588 = vmatmul.mubr.bf16.gmra.mrb[0].mxu0 %v413
    %v589 = vpop.f32.mrb[0].mxu0
    %v590 = vadd.f32 %v448, %v589
    %v591 = vpop.f32.mrb[0].mxu0
    %v592 = vadd.f32 %v452, %v591
    %v593 = vpop.f32.mrb[0].mxu0
    %v594 = vadd.f32 %v448, %v593
    %v595 = vpop.f32.mrb[0].mxu0
    %v596 = vadd.f32 %v452, %v595
    %597 = vmatprep.mubr.bf16.mxu0 0
    %598 = vmatmul.mubr.bf16.gmra.mrb[0].mxu0 %v414
    %v599 = vpop.f32.mrb[0].mxu0
    %v600 = vadd.f32 %v448, %v599
    %v601 = vpop.f32.mrb[0].mxu0
    %v602 = vadd.f32 %v452, %v601
    %v603 = vpop.f32.mrb[0].mxu0
    %v604 = vadd.f32 %v448, %v603
    %v605 = vpop.f32.mrb[0].mxu0
    %v606 = vadd.f32 %v452, %v605
    %607 = vmatprep.mubr.bf16.mxu0 0
    %608 = vmatmul.mubr.bf16.gmra.mrb[0].mxu0 %v415
    %v609 = vpop.f32.mrb[0].mxu0
    %v610 = vadd.f32 %v448, %v609
    %v611 = vpop.f32.mrb[0].mxu0
    %v612 = vadd.f32 %v452, %v611
    %v613 = vpop.f32.mrb[0].mxu0
    %v614 = vadd.f32 %v448, %v613
    %v615 = vpop.f32.mrb[0].mxu0
    %v616 = vadd.f32 %v452, %v615
    %617 = vmatprep.mubr.bf16.mxu0 0
    %618 = vmatmul.mubr.bf16.gmra.mrb[0].mxu0 %v416
    %v619 = vpop.f32.mrb[0].mxu0
    %v620 = vadd.f32 %v448, %v619
    %v621 = vpop.f32.mrb[0].mxu0
    %v622 = vadd.f32 %v452, %v621
    %v623 = vpop.f32.mrb[0].mxu0
    %v624 = vadd.f32 %v448, %v623
    %v625 = vpop.f32.mrb[0].mxu0
    %v626 = vadd.f32 %v452, %v625
    %627 = vmatprep.mubr.bf16.mxu0 0
    %628 = vmatmul.mubr.bf16.gmra.mrb[0].mxu0 %v417
    %v629 = vpop.f32.mrb[0].mxu0
    %v630 = vadd.f32 %v448, %v629
    %v631 = vpop.f32.mrb[0].mxu0
    %v632 = vadd.f32 %v452, %v631
    %v633 = vpop.f32.mrb[0].mxu0
    %v634 = vadd.f32 %v448, %v633
    %v635 = vpop.f32.mrb[0].mxu0
    %v636 = vadd.f32 %v452, %v635
    %637 = vmatprep.mubr.bf16.mxu0 0
    %638 = vmatmul.mubr.bf16.gmra.mrb[0].mxu0 %v418
    %v639 = vpop.f32.mrb[0].mxu0
    %v640 = vadd.f32 %v448, %v639
    %v641 = vpop.f32.mrb[0].mxu0
    %v642 = vadd.f32 %v452, %v641
    %v643 = vpop.f32.mrb[0].mxu0
    %v644 = vadd.f32 %v448, %v643
    %v645 = vpop.f32.mrb[0].mxu0
    %v646 = vadd.f32 %v452, %v645
    %647 = vmatprep.mubr.bf16.mxu0 0
    %648 = vmatmul.mubr.bf16.gmra.mrb[0].mxu0 %v419
    %v649 = vpop.f32.mrb[0].mxu0
    %v650 = vadd.f32 %v448, %v649
    %v651 = vpop.f32.mrb[0].mxu0
    %v652 = vadd.f32 %v452, %v651
    %v653 = vpop.f32.mrb[0].mxu0
    %v654 = vadd.f32 %v448, %v653
    %v655 = vpop.f32.mrb[0].mxu0
    %v656 = vadd.f32 %v452, %v655
    %657 = vmatprep.mubr.bf16.mxu0 0
    %658 = vmatmul.mubr.bf16.gmra.mrb[0].mxu0 %v420
    %v659 = vpop.f32.mrb[0].mxu0
    %v660 = vadd.f32 %v448, %v659
    %v661 = vpop.f32.mrb[0].mxu0
    %v662 = vadd.f32 %v452, %v661
    %v663 = vpop.f32.mrb[0].mxu0
    %v664 = vadd.f32 %v448, %v663
    %v665 = vpop.f32.mrb[0].mxu0
    %v666 = vadd.f32 %v452, %v665
    %667 = vmatprep.mubr.bf16.mxu0 0
    %668 = vmatmul.mubr.bf16.gmra.mrb[0].mxu0 %v421
    %v669 = vpop.f32.mrb[0].mxu0
    %v670 = vadd.f32 %v448, %v669
    %v671 = vpop.f32.mrb[0].mxu0
    %v672 = vadd.f32 %v452, %v671
    %v673 = vpop.f32.mrb[0].mxu0
    %v674 = vadd.f32 %v448, %v673
    %v675 = vpop.f32.mrb[0].mxu0
    %v676 = vadd.f32 %v452, %v675
    %677 = vmatprep.mubr.bf16.mxu0 0
    %678 = vmatmul.mubr.bf16.gmra.mrb[0].mxu0 %v422
    %v679 = vpop.f32.mrb[0].mxu0
    %v680 = vadd.f32 %v448, %v679
    %v681 = vpop.f32.mrb[0].mxu0
    %v682 = vadd.f32 %v452, %v681
    %v683 = vpop.f32.mrb[0].mxu0
    %v684 = vadd.f32 %v448, %v683
    %v685 = vpop.f32.mrb[0].mxu0
    %v686 = vadd.f32 %v452, %v685
    %687 = vmatprep.mubr.bf16.mxu0 0
    %688 = vmatmul.mubr.bf16.gmra.mrb[0].mxu0 %v423
    %v689 = vpop.f32.mrb[0].mxu0
    %v690 = vadd.f32 %v448, %v689
    %v691 = vpop.f32.mrb[0].mxu0
    %v692 = vadd.f32 %v452, %v691
    %v693 = vpop.f32.mrb[0].mxu0
    %v694 = vadd.f32 %v448, %v693
    %v695 = vpop.f32.mrb[0].mxu0
    %v696 = vadd.f32 %v452, %v695
    %697 = vmatprep.mubr.bf16.mxu0 0
    %698 = vmatmul.mubr.bf16.gmra.mrb[0].mxu0 %v424
    %v699 = vpop.f32.mrb[0].mxu0
    %v700 = vadd.f32 %v448, %v699
    %v701 = vpop.f32.mrb[0].mxu0
    %v702 = vadd.f32 %v452, %v701
    %v703 = vpop.f32.mrb[0].mxu0
    %v704 = vadd.f32 %v448, %v703
    %v705 = vpop.f32.mrb[0].mxu0
    %v706 = vadd.f32 %v452, %v705
    %707 = vmatprep.mubr.bf16.mxu0 0
    %708 = vmatmul.mubr.bf16.gmra.mrb[0].mxu0 %v425
    %v709 = vpop.f32.mrb[0].mxu0
    %v710 = vadd.f32 %v448, %v709
    %v711 = vpop.f32.mrb[0].mxu0
    %v712 = vadd.f32 %v452, %v711
    %v713 = vpop.f32.mrb[0].mxu0
    %v714 = vadd.f32 %v448, %v713
    %v715 = vpop.f32.mrb[0].mxu0
    %v716 = vadd.f32 %v452, %v715
    %717 = vmatprep.mubr.bf16.mxu0 0
    %718 = vmatmul.mubr.bf16.gmra.mrb[0].mxu0 %v426
    %v719 = vpop.f32.mrb[0].mxu0
    %v720 = vadd.f32 %v448, %v719
    %v721 = vpop.f32.mrb[0].mxu0
    %v722 = vadd.f32 %v452, %v721
    %v723 = vpop.f32.mrb[0].mxu0
    %v724 = vadd.f32 %v448, %v723
    %v725 = vpop.f32.mrb[0].mxu0
    %v726 = vadd.f32 %v452, %v725
    %727 = vdwg.mxu0
    %728 = vst [vmem:[#allocation9] sm:$0xff] %v570
    %729 = vst [vmem:[#allocation9 + $0x8] sm:$0xff] %v572
    %730 = vst [vmem:[#allocation9 + $0x10] sm:$0xff] %v574
    %731 = vst [vmem:[#allocation9 + $0x18] sm:$0xff] %v576
    %732 = vst [vmem:[#allocation9 + $0x20] sm:$0xff] %v580
    %733 = vst [vmem:[#allocation9 + $0x28] sm:$0xff] %v582
    %734 = vst [vmem:[#allocation9 + $0x30] sm:$0xff] %v584
    %735 = vst [vmem:[#allocation9 + $0x38] sm:$0xff] %v586
    %736 = vst [vmem:[#allocation9 + $0x40] sm:$0xff] %v590
    %737 = vst [vmem:[#allocation9 + $0x48] sm:$0xff] %v592
    %738 = vst [vmem:[#allocation9 + $0x50] sm:$0xff] %v594
    %739 = vst [vmem:[#allocation9 + $0x58] sm:$0xff] %v596
    %740 = vst [vmem:[#allocation9 + $0x60] sm:$0xff] %v600
    %741 = vst [vmem:[#allocation9 + $0x68] sm:$0xff] %v602
    %742 = vst [vmem:[#allocation9 + $0x70] sm:$0xff] %v604
    %743 = vst [vmem:[#allocation9 + $0x78] sm:$0xff] %v606
    %744 = vst [vmem:[#allocation9 + $0x80] sm:$0xff] %v610
    %745 = vst [vmem:[#allocation9 + $0x88] sm:$0xff] %v612
    %746 = vst [vmem:[#allocation9 + $0x90] sm:$0xff] %v614
    %747 = vst [vmem:[#allocation9 + $0x98] sm:$0xff] %v616
    %748 = vst [vmem:[#allocation9 + $0xa0] sm:$0xff] %v620
    %749 = vst [vmem:[#allocation9 + $0xa8] sm:$0xff] %v622
    %750 = vst [vmem:[#allocation9 + $0xb0] sm:$0xff] %v624
    %751 = vst [vmem:[#allocation9 + $0xb8] sm:$0xff] %v626
    %752 = vst [vmem:[#allocation9 + $0xc0] sm:$0xff] %v630
    %753 = vst [vmem:[#allocation9 + $0xc8] sm:$0xff] %v632
    %754 = vst [vmem:[#allocation9 + $0xd0] sm:$0xff] %v634
    %755 = vst [vmem:[#allocation9 + $0xd8] sm:$0xff] %v636
    %756 = vst [vmem:[#allocation9 + $0xe0] sm:$0xff] %v640
    %757 = vst [vmem:[#allocation9 + $0xe8] sm:$0xff] %v642
    %758 = vst [vmem:[#allocation9 + $0xf0] sm:$0xff] %v644
    %759 = vst [vmem:[#allocation9 + $0xf8] sm:$0xff] %v646
    %760 = vst [vmem:[#allocation9 + $0x100] sm:$0xff] %v650
    %761 = vst [vmem:[#allocation9 + $0x108] sm:$0xff] %v652
    %762 = vst [vmem:[#allocation9 + $0x110] sm:$0xff] %v654
    %763 = vst [vmem:[#allocation9 + $0x118] sm:$0xff] %v656
    %764 = vst [vmem:[#allocation9 + $0x120] sm:$0xff] %v660
    %765 = vst [vmem:[#allocation9 + $0x128] sm:$0xff] %v662
    %766 = vst [vmem:[#allocation9 + $0x130] sm:$0xff] %v664
    %767 = vst [vmem:[#allocation9 + $0x138] sm:$0xff] %v666
    %768 = vst [vmem:[#allocation9 + $0x140] sm:$0xff] %v670
    %769 = vst [vmem:[#allocation9 + $0x148] sm:$0xff] %v672
    %770 = vst [vmem:[#allocation9 + $0x150] sm:$0xff] %v674
    %771 = vst [vmem:[#allocation9 + $0x158] sm:$0xff] %v676
    %772 = vst [vmem:[#allocation9 + $0x160] sm:$0xff] %v680
    %773 = vst [vmem:[#allocation9 + $0x168] sm:$0xff] %v682
    %774 = vst [vmem:[#allocation9 + $0x170] sm:$0xff] %v684
    %775 = vst [vmem:[#allocation9 + $0x178] sm:$0xff] %v686
    %776 = vst [vmem:[#allocation9 + $0x180] sm:$0xff] %v690
    %777 = vst [vmem:[#allocation9 + $0x188] sm:$0xff] %v692
    %778 = vst [vmem:[#allocation9 + $0x190] sm:$0xff] %v694
    %779 = vst [vmem:[#allocation9 + $0x198] sm:$0xff] %v696
    %780 = vst [vmem:[#allocation9 + $0x1a0] sm:$0xff] %v700
    %781 = vst [vmem:[#allocation9 + $0x1a8] sm:$0xff] %v702
    %782 = vst [vmem:[#allocation9 + $0x1b0] sm:$0xff] %v704
    %783 = vst [vmem:[#allocation9 + $0x1b8] sm:$0xff] %v706
    %784 = vst [vmem:[#allocation9 + $0x1c0] sm:$0xff] %v710
    %785 = vst [vmem:[#allocation9 + $0x1c8] sm:$0xff] %v712
    %786 = vst [vmem:[#allocation9 + $0x1d0] sm:$0xff] %v714
    %787 = vst [vmem:[#allocation9 + $0x1d8] sm:$0xff] %v716
    %788 = vst [vmem:[#allocation9 + $0x1e0] sm:$0xff] %v720
    %789 = vst [vmem:[#allocation9 + $0x1e8] sm:$0xff] %v722
    %790 = vst [vmem:[#allocation9 + $0x1f0] sm:$0xff] %v724
    %791 = vst [vmem:[#allocation9 + $0x1f8] sm:$0xff] %v726
    // Predicated region
    $region38: #{decoder_forward.1} parent=1 // pred_check
      _
    $region39: #{decoder_forward.1} parent=1 // pred_check_branch
      %793 = sbr.rel (0) target = $region41
    $region40: #{decoder_forward.1} parent=1 // pred_region
      %s795 = ssub.s32 8192, 8192
      %796 = vsyncadd [#allocation5], %s795
      %s797 = sshll.u32 [#allocation9], 4
      %s798 = int_to_ptr.vmem [resolvable:$true] %s797
      %803 = dma.vmem_to_hbm [thread:$0]  %s798, 8192, %s5, [#allocation5], 256, 256, 16
    $region41: #{decoder_forward.1} parent=1 // pred_fallthru
      _
    // Predicated region
    $region42: #{decoder_forward.1} parent=1 // pred_check
      _
    $region43: #{decoder_forward.1} parent=1 // pred_check_branch
      %805 = sbr.rel (0) target = $region45
    $region44: #{decoder_forward.1} parent=1 // pred_region
      %806 = dma.done [#allocation5], 8192
    $region45: #{decoder_forward.1} parent=1 // pred_fallthru
      _
    %807 = vsyncpa [#allocation4], 1
    %808 = vsyncpa [#allocation7], 1
    %809 = vsyncpa [#allocation5], 1

</llo_original>
